<compile_context>
chip_gen: v7x
topology: tpu7x:2x2x1
jax: 0.10.0
libtpu: 0.0.40
codegen_flags: <defaults>
</compile_context>

<pallas_src>
import functools

import jax
import jax.numpy as jnp
from jax.experimental import pallas as pl
from jax.experimental.pallas import tpu as pltpu

NEG_SLOPE = 0.01
BN_EPS = 1e-5
H = 128  # lane-padded hidden / output width


def _leaky_relu(x):
    return jnp.where(x > 0, x, NEG_SLOPE * x)


def _round_up(a, b):
    return (a + b - 1) // b * b


def _choose_tile(n, tm):
    """Row tile: multiple of 16, no larger than needed, >=2 grid steps if possible."""
    tm_eff = max(16, _round_up(min(tm, _round_up(n, 16)), 16))
    if n > 16:
        # v7x has 2 TensorCores; keep the "parallel" grid axis at >=2 steps.
        half = max(16, _round_up((n + 1) // 2, 16))
        tm_eff = min(tm_eff, half)
    return tm_eff


def dnn3_kernel(x_ref, w1_ref, ws_ref, bs_ref, o_ref):
    # x_ref:  (tm, Fin)      f32   (cast to bf16 in-kernel)
    # w1_ref: (Fin, 128)     bf16
    # ws_ref: (5, 128, 128)  bf16  (layers 2..6, zero-padded)
    # bs_ref: (6, 1, 128)    f32   (biases, zero-padded)
    # o_ref:  (tm, 128)      bf16  (lane-dense output, column-sliced in wrapper)
    x = x_ref[...].astype(jnp.bfloat16)
    h = jnp.dot(x, w1_ref[...], preferred_element_type=jnp.float32) + bs_ref[0]
    h = _leaky_relu(h)
    for l in range(4):
        h = jnp.dot(h.astype(jnp.bfloat16), ws_ref[l],
                    preferred_element_type=jnp.float32) + bs_ref[l + 1]
        h = _leaky_relu(h)
    # final classifier layer (no activation)
    out = jnp.dot(h.astype(jnp.bfloat16), ws_ref[4],
                  preferred_element_type=jnp.float32) + bs_ref[5]
    o_ref[...] = out.astype(o_ref.dtype)


def _fold_bn_into_linear(gamma, beta, mean, var, w, b):
    """BN(x) @ W + b == x @ W' + b'  (W stored as (in, out))."""
    scale = gamma / jnp.sqrt(var + BN_EPS)          # (in,)
    shift = beta - mean * scale                     # (in,)
    w_f = w * scale[:, None]                        # (in, out)
    b_f = b + shift @ w                             # (out,)
    return w_f, b_f


@functools.partial(jax.jit, static_argnames=("tm",))
def dnn3_feature_forward(x, params, tm=1024):
    """x: (N, 59) float32. Returns (N, output_class) float32."""
    N, Fin = x.shape
    bns, lins = params
    out_dim = lins[5][0].shape[1]

    # --- fold each BatchNorm into the Linear that follows it (f32 algebra) ---
    fused = []
    for i in range(5):
        g, bta, mu, var = bns[i]
        w, b = lins[i]
        fused.append(_fold_bn_into_linear(g, bta, mu, var, w, b))
    fused.append(lins[5])                           # final Linear, no BN before

    # --- zero-pad to 128-lane-dense shapes; weights to bf16, biases stay f32 ---
    # Zero-padded lanes stay exactly zero through LeakyReLU (f(0)=0) and zero
    # weight rows, so lane padding never corrupts valid outputs.
    w1, b1 = fused[0]
    w1p = jnp.pad(w1, ((0, 0), (0, H - w1.shape[1]))).astype(jnp.bfloat16)
    w_list = []
    b_list = [jnp.pad(b1, (0, H - b1.shape[0]))]
    for i in range(1, 6):
        w, b = fused[i]
        wp = jnp.pad(w, ((0, H - w.shape[0]), (0, H - w.shape[1])))
        w_list.append(wp.astype(jnp.bfloat16))
        b_list.append(jnp.pad(b, (0, H - b.shape[0])))
    w_stack = jnp.stack(w_list)                                     # (5,128,128)
    b_stack = jnp.stack(b_list).reshape(6, 1, H).astype(jnp.float32)

    # --- row tiling: large tiles (amortize ~0.35 us/step); tail via partial block ---
    tm_eff = _choose_tile(N, tm)
    grid = (pl.cdiv(N, tm_eff),)

    flops = 2 * N * (Fin * H + 5 * H * H)
    bytes_accessed = (N * Fin * 4          # x read (f32, unpadded in HBM)
                      + N * H * 2          # out write (bf16)
                      + w1p.size * 2 + w_stack.size * 2 + b_stack.size * 4)

    out_p = pl.pallas_call(
        dnn3_kernel,
        out_shape=jax.ShapeDtypeStruct((N, H), jnp.bfloat16),
        grid=grid,
        in_specs=[
            pl.BlockSpec((tm_eff, Fin), lambda i: (i, 0)),   # x row tile (f32)
            pl.BlockSpec((Fin, H), lambda i: (0, 0)),        # W1 (grid-invariant)
            pl.BlockSpec((5, H, H), lambda i: (0, 0, 0)),    # W2..W6 stacked
            pl.BlockSpec((6, 1, H), lambda i: (0, 0, 0)),    # biases stacked
        ],
        out_specs=pl.BlockSpec((tm_eff, H), lambda i: (i, 0)),
        compiler_params=pltpu.CompilerParams(
            dimension_semantics=("parallel",),
            vmem_limit_bytes=32 * 1024 * 1024),
        cost_estimate=pl.CostEstimate(flops=flops, transcendentals=0,
                                      bytes_accessed=bytes_accessed),
    )(x, w1p, w_stack, b_stack)

    # Column slice back to the logical output width, restoring f32 semantics.
    # (XLA fuses the slice + convert into one pass over the bf16 kernel output.)
    return out_p[:, :out_dim].astype(jnp.float32)


def init_params(key, number_gesture=49, class_rest=False):
    """Deterministic synthetic parameters with the module's shapes."""
    output_class = number_gesture + int(class_rest is True)
    dims = [59, 64, 64, 64, 64, 64, output_class]
    bns, lins = [], []
    for i in range(6):
        fan_in, fan_out = dims[i], dims[i + 1]
        key, kw, kb, kg, kbt, km, kv = jax.random.split(key, 7)
        bound = 1.0 / jnp.sqrt(fan_in)
        w = jax.random.uniform(kw, (fan_in, fan_out), jnp.float32, -bound, bound)
        b = jax.random.uniform(kb, (fan_out,), jnp.float32, -bound, bound)
        lins.append((w, b))
        if i < 5:  # 5 BatchNorm layers precede the first 5 Linears
            gamma = 1.0 + 0.1 * jax.random.normal(kg, (fan_in,), jnp.float32)
            beta = 0.1 * jax.random.normal(kbt, (fan_in,), jnp.float32)
            mean = 0.1 * jax.random.normal(km, (fan_in,), jnp.float32)
            var = jnp.abs(1.0 + 0.1 * jax.random.normal(kv, (fan_in,), jnp.float32))
            bns.append((gamma, beta, mean, var))
    return (tuple(bns), tuple(lins))


def reference_forward(x, params):
    """Plain-JAX f32 reference (eval-mode BN, identity dropout)."""
    bns, lins = params
    h = x
    for i in range(5):
        g, bta, mu, var = bns[i]
        h = (h - mu) / jnp.sqrt(var + BN_EPS) * g + bta
        w, b = lins[i]
        h = h @ w + b
        h = jnp.where(h > 0, h, NEG_SLOPE * h)
    w, b = lins[5]
    return h @ w + b


if __name__ == "__main__":
    key = jax.random.PRNGKey(0)
    kx, kx2, kp = jax.random.split(key, 3)
    params = init_params(kp)

    # Small case: N not a multiple of the tile -> exercises the partial last block.
    N1 = 24
    x1 = jax.random.normal(kx, (N1, 59), jnp.float32)
    out1 = jax.block_until_ready(dnn3_feature_forward(x1, params, tm=1024))
    ref1 = reference_forward(x1, params)
    assert out1.shape == (N1, 49), out1.shape
    assert jnp.allclose(out1, ref1, atol=2e-2, rtol=2e-2), \
        float(jnp.max(jnp.abs(out1 - ref1)))

    # Larger case: exercises the >=2-grid-step cap and a bigger row tile.
    N2 = 1000
    x2 = jax.random.normal(kx2, (N2, 59), jnp.float32)
    out2 = jax.block_until_ready(dnn3_feature_forward(x2, params, tm=1024))
    ref2 = reference_forward(x2, params)
    assert out2.shape == (N2, 49), out2.shape
    # bf16 MXU inputs + bf16 output store -> loosened tolerance vs f32 reference.
    assert jnp.allclose(out2, ref2, atol=2e-2, rtol=2e-2), \
        float(jnp.max(jnp.abs(out2 - ref2)))

    print("KERNEL_OK")
</pallas_src>

<mosaic_0001>
module attributes {stable_mosaic.version = 11 : i64} {
  func.func @dnn3_kernel(%arg0: i32, %arg1: memref<16x59xf32, #tpu.memory_space<vmem>>, %arg2: memref<59x128xbf16, #tpu.memory_space<vmem>>, %arg3: memref<5x128x128xbf16, #tpu.memory_space<vmem>>, %arg4: memref<6x1x128xf32, #tpu.memory_space<vmem>>, %arg5: memref<16x128xbf16, #tpu.memory_space<vmem>>) attributes {dimension_semantics = [#tpu.dimension_semantics<parallel>], iteration_bounds = array<i64: 2>, scalar_prefetch = 0 : i64, scratch_operands = 0 : i64, tpu.core_type = #tpu.core_type<tc>, window_params = [{transform_indices = @transform_0, window_bounds = array<i64: 16, 59>}, {pipeline_mode = #tpu.pipeline_mode<synchronous>, transform_indices = @transform_1, window_bounds = array<i64: 59, 128>}, {pipeline_mode = #tpu.pipeline_mode<synchronous>, transform_indices = @transform_2, window_bounds = array<i64: 5, 128, 128>}, {pipeline_mode = #tpu.pipeline_mode<synchronous>, transform_indices = @transform_3, window_bounds = array<i64: 6, 1, 128>}, {transform_indices = @transform_4, window_bounds = array<i64: 16, 128>}]} {
    %c0 = arith.constant 0 : index
    %c0_0 = arith.constant 0 : index
    %0 = vector.load %arg1[%c0, %c0_0] : memref<16x59xf32, #tpu.memory_space<vmem>>, vector<16x59xf32>
    %1 = arith.truncf %0 : vector<16x59xf32> to vector<16x59xbf16>
    %c0_1 = arith.constant 0 : index
    %c0_2 = arith.constant 0 : index
    %2 = vector.load %arg2[%c0_1, %c0_2] : memref<59x128xbf16, #tpu.memory_space<vmem>>, vector<59x128xbf16>
    %cst = arith.constant dense<0.000000e+00> : vector<16x128xf32>
    %3 = tpu.matmul %1, %2, %cst {dimension_numbers = #tpu.dot_dimension_numbers<[1], [0], [0], [1], [0, 0, 1, 1], [], []>} : vector<16x59xbf16>, vector<59x128xbf16>, vector<16x128xf32> -> vector<16x128xf32>
    %c0_3 = arith.constant 0 : index
    %c0_4 = arith.constant 0 : index
    %c0_5 = arith.constant 0 : index
    %4 = vector.load %arg4[%c0_3, %c0_4, %c0_5] : memref<6x1x128xf32, #tpu.memory_space<vmem>>, vector<1x1x128xf32>
    %5 = vector.shape_cast %4 : vector<1x1x128xf32> to vector<1x128xf32>
    %6 = vector.broadcast %5 : vector<1x128xf32> to vector<16x128xf32>
    %7 = arith.addf %3, %6 : vector<16x128xf32>
    %cst_6 = arith.constant 0.000000e+00 : f32
    %8 = vector.broadcast %cst_6 : f32 to vector<16x128xf32>
    %9 = arith.cmpf ogt, %7, %8 : vector<16x128xf32>
    %cst_7 = arith.constant 0.00999999977 : f32
    %10 = vector.broadcast %cst_7 : f32 to vector<16x128xf32>
    %11 = arith.mulf %10, %7 : vector<16x128xf32>
    %12 = arith.select %9, %7, %11 : vector<16x128xi1>, vector<16x128xf32>
    %13 = arith.truncf %12 : vector<16x128xf32> to vector<16x128xbf16>
    %c0_8 = arith.constant 0 : index
    %c0_9 = arith.constant 0 : index
    %c0_10 = arith.constant 0 : index
    %14 = vector.load %arg3[%c0_8, %c0_9, %c0_10] : memref<5x128x128xbf16, #tpu.memory_space<vmem>>, vector<1x128x128xbf16>
    %15 = vector.shape_cast %14 : vector<1x128x128xbf16> to vector<128x128xbf16>
    %cst_11 = arith.constant dense<0.000000e+00> : vector<16x128xf32>
    %16 = tpu.matmul %13, %15, %cst_11 {dimension_numbers = #tpu.dot_dimension_numbers<[1], [0], [0], [1], [0, 0, 1, 1], [], []>} : vector<16x128xbf16>, vector<128x128xbf16>, vector<16x128xf32> -> vector<16x128xf32>
    %c1 = arith.constant 1 : index
    %c0_12 = arith.constant 0 : index
    %c0_13 = arith.constant 0 : index
    %17 = vector.load %arg4[%c1, %c0_12, %c0_13] : memref<6x1x128xf32, #tpu.memory_space<vmem>>, vector<1x1x128xf32>
    %18 = vector.shape_cast %17 : vector<1x1x128xf32> to vector<1x128xf32>
    %19 = vector.broadcast %18 : vector<1x128xf32> to vector<16x128xf32>
    %20 = arith.addf %16, %19 : vector<16x128xf32>
    %cst_14 = arith.constant 0.000000e+00 : f32
    %21 = vector.broadcast %cst_14 : f32 to vector<16x128xf32>
    %22 = arith.cmpf ogt, %20, %21 : vector<16x128xf32>
    %cst_15 = arith.constant 0.00999999977 : f32
    %23 = vector.broadcast %cst_15 : f32 to vector<16x128xf32>
    %24 = arith.mulf %23, %20 : vector<16x128xf32>
    %25 = arith.select %22, %20, %24 : vector<16x128xi1>, vector<16x128xf32>
    %26 = arith.truncf %25 : vector<16x128xf32> to vector<16x128xbf16>
    %c1_16 = arith.constant 1 : index
    %c0_17 = arith.constant 0 : index
    %c0_18 = arith.constant 0 : index
    %27 = vector.load %arg3[%c1_16, %c0_17, %c0_18] : memref<5x128x128xbf16, #tpu.memory_space<vmem>>, vector<1x128x128xbf16>
    %28 = vector.shape_cast %27 : vector<1x128x128xbf16> to vector<128x128xbf16>
    %cst_19 = arith.constant dense<0.000000e+00> : vector<16x128xf32>
    %29 = tpu.matmul %26, %28, %cst_19 {dimension_numbers = #tpu.dot_dimension_numbers<[1], [0], [0], [1], [0, 0, 1, 1], [], []>} : vector<16x128xbf16>, vector<128x128xbf16>, vector<16x128xf32> -> vector<16x128xf32>
    %c2 = arith.constant 2 : index
    %c0_20 = arith.constant 0 : index
    %c0_21 = arith.constant 0 : index
    %30 = vector.load %arg4[%c2, %c0_20, %c0_21] : memref<6x1x128xf32, #tpu.memory_space<vmem>>, vector<1x1x128xf32>
    %31 = vector.shape_cast %30 : vector<1x1x128xf32> to vector<1x128xf32>
    %32 = vector.broadcast %31 : vector<1x128xf32> to vector<16x128xf32>
    %33 = arith.addf %29, %32 : vector<16x128xf32>
    %cst_22 = arith.constant 0.000000e+00 : f32
    %34 = vector.broadcast %cst_22 : f32 to vector<16x128xf32>
    %35 = arith.cmpf ogt, %33, %34 : vector<16x128xf32>
    %cst_23 = arith.constant 0.00999999977 : f32
    %36 = vector.broadcast %cst_23 : f32 to vector<16x128xf32>
    %37 = arith.mulf %36, %33 : vector<16x128xf32>
    %38 = arith.select %35, %33, %37 : vector<16x128xi1>, vector<16x128xf32>
    %39 = arith.truncf %38 : vector<16x128xf32> to vector<16x128xbf16>
    %c2_24 = arith.constant 2 : index
    %c0_25 = arith.constant 0 : index
    %c0_26 = arith.constant 0 : index
    %40 = vector.load %arg3[%c2_24, %c0_25, %c0_26] : memref<5x128x128xbf16, #tpu.memory_space<vmem>>, vector<1x128x128xbf16>
    %41 = vector.shape_cast %40 : vector<1x128x128xbf16> to vector<128x128xbf16>
    %cst_27 = arith.constant dense<0.000000e+00> : vector<16x128xf32>
    %42 = tpu.matmul %39, %41, %cst_27 {dimension_numbers = #tpu.dot_dimension_numbers<[1], [0], [0], [1], [0, 0, 1, 1], [], []>} : vector<16x128xbf16>, vector<128x128xbf16>, vector<16x128xf32> -> vector<16x128xf32>
    %c3 = arith.constant 3 : index
    %c0_28 = arith.constant 0 : index
    %c0_29 = arith.constant 0 : index
    %43 = vector.load %arg4[%c3, %c0_28, %c0_29] : memref<6x1x128xf32, #tpu.memory_space<vmem>>, vector<1x1x128xf32>
    %44 = vector.shape_cast %43 : vector<1x1x128xf32> to vector<1x128xf32>
    %45 = vector.broadcast %44 : vector<1x128xf32> to vector<16x128xf32>
    %46 = arith.addf %42, %45 : vector<16x128xf32>
    %cst_30 = arith.constant 0.000000e+00 : f32
    %47 = vector.broadcast %cst_30 : f32 to vector<16x128xf32>
    %48 = arith.cmpf ogt, %46, %47 : vector<16x128xf32>
    %cst_31 = arith.constant 0.00999999977 : f32
    %49 = vector.broadcast %cst_31 : f32 to vector<16x128xf32>
    %50 = arith.mulf %49, %46 : vector<16x128xf32>
    %51 = arith.select %48, %46, %50 : vector<16x128xi1>, vector<16x128xf32>
    %52 = arith.truncf %51 : vector<16x128xf32> to vector<16x128xbf16>
    %c3_32 = arith.constant 3 : index
    %c0_33 = arith.constant 0 : index
    %c0_34 = arith.constant 0 : index
    %53 = vector.load %arg3[%c3_32, %c0_33, %c0_34] : memref<5x128x128xbf16, #tpu.memory_space<vmem>>, vector<1x128x128xbf16>
    %54 = vector.shape_cast %53 : vector<1x128x128xbf16> to vector<128x128xbf16>
    %cst_35 = arith.constant dense<0.000000e+00> : vector<16x128xf32>
    %55 = tpu.matmul %52, %54, %cst_35 {dimension_numbers = #tpu.dot_dimension_numbers<[1], [0], [0], [1], [0, 0, 1, 1], [], []>} : vector<16x128xbf16>, vector<128x128xbf16>, vector<16x128xf32> -> vector<16x128xf32>
    %c4 = arith.constant 4 : index
    %c0_36 = arith.constant 0 : index
    %c0_37 = arith.constant 0 : index
    %56 = vector.load %arg4[%c4, %c0_36, %c0_37] : memref<6x1x128xf32, #tpu.memory_space<vmem>>, vector<1x1x128xf32>
    %57 = vector.shape_cast %56 : vector<1x1x128xf32> to vector<1x128xf32>
    %58 = vector.broadcast %57 : vector<1x128xf32> to vector<16x128xf32>
    %59 = arith.addf %55, %58 : vector<16x128xf32>
    %cst_38 = arith.constant 0.000000e+00 : f32
    %60 = vector.broadcast %cst_38 : f32 to vector<16x128xf32>
    %61 = arith.cmpf ogt, %59, %60 : vector<16x128xf32>
    %cst_39 = arith.constant 0.00999999977 : f32
    %62 = vector.broadcast %cst_39 : f32 to vector<16x128xf32>
    %63 = arith.mulf %62, %59 : vector<16x128xf32>
    %64 = arith.select %61, %59, %63 : vector<16x128xi1>, vector<16x128xf32>
    %65 = arith.truncf %64 : vector<16x128xf32> to vector<16x128xbf16>
    %c4_40 = arith.constant 4 : index
    %c0_41 = arith.constant 0 : index
    %c0_42 = arith.constant 0 : index
    %66 = vector.load %arg3[%c4_40, %c0_41, %c0_42] : memref<5x128x128xbf16, #tpu.memory_space<vmem>>, vector<1x128x128xbf16>
    %67 = vector.shape_cast %66 : vector<1x128x128xbf16> to vector<128x128xbf16>
    %cst_43 = arith.constant dense<0.000000e+00> : vector<16x128xf32>
    %68 = tpu.matmul %65, %67, %cst_43 {dimension_numbers = #tpu.dot_dimension_numbers<[1], [0], [0], [1], [0, 0, 1, 1], [], []>} : vector<16x128xbf16>, vector<128x128xbf16>, vector<16x128xf32> -> vector<16x128xf32>
    %c5 = arith.constant 5 : index
    %c0_44 = arith.constant 0 : index
    %c0_45 = arith.constant 0 : index
    %69 = vector.load %arg4[%c5, %c0_44, %c0_45] : memref<6x1x128xf32, #tpu.memory_space<vmem>>, vector<1x1x128xf32>
    %70 = vector.shape_cast %69 : vector<1x1x128xf32> to vector<1x128xf32>
    %71 = vector.broadcast %70 : vector<1x128xf32> to vector<16x128xf32>
    %72 = arith.addf %68, %71 : vector<16x128xf32>
    %73 = arith.truncf %72 : vector<16x128xf32> to vector<16x128xbf16>
    %c0_46 = arith.constant 0 : index
    %c0_47 = arith.constant 0 : index
    %74 = vector.load %arg5[%c0_46, %c0_47] : memref<16x128xbf16, #tpu.memory_space<vmem>>, vector<16x128xbf16>
    tpu.vector_store %arg5[%c0_46, %c0_47], %73 {strides = array<i32>} : memref<16x128xbf16, #tpu.memory_space<vmem>>, vector<16x128xbf16>,
    return
  }
  func.func @transform_0(%arg0: i32) -> (i32, i32) {
    %c0_i32 = arith.constant 0 : i32
    %c0_i32_0 = arith.constant 0 : i32
    return %arg0, %c0_i32 : i32, i32
  }
  func.func @transform_1(%arg0: i32) -> (i32, i32) {
    %c0_i32 = arith.constant 0 : i32
    %c0_i32_0 = arith.constant 0 : i32
    %c0_i32_1 = arith.constant 0 : i32
    return %c0_i32, %c0_i32_0 : i32, i32
  }
  func.func @transform_2(%arg0: i32) -> (i32, i32, i32) {
    %c0_i32 = arith.constant 0 : i32
    %c0_i32_0 = arith.constant 0 : i32
    %c0_i32_1 = arith.constant 0 : i32
    %c0_i32_2 = arith.constant 0 : i32
    return %c0_i32, %c0_i32_0, %c0_i32_1 : i32, i32, i32
  }
  func.func @transform_3(%arg0: i32) -> (i32, i32, i32) {
    %c0_i32 = arith.constant 0 : i32
    %c0_i32_0 = arith.constant 0 : i32
    %c0_i32_1 = arith.constant 0 : i32
    %c0_i32_2 = arith.constant 0 : i32
    return %c0_i32, %c0_i32_0, %c0_i32_1 : i32, i32, i32
  }
  func.func @transform_4(%arg0: i32) -> (i32, i32) {
    %c0_i32 = arith.constant 0 : i32
    %c0_i32_0 = arith.constant 0 : i32
    return %arg0, %c0_i32 : i32, i32
  }
}

</mosaic_0001>

<llo_original>
// kernel: dnn3_feature_forward.1
$region0: #{dnn3_feature_forward.1}
  #allocation0 [shape = 'u32[]', space=smem, size = 0x4, offset = 0x4, fixed_abs, tag = 'smem constant byte address 0x4 - core index']
  #allocation1 [shape = 'u32[144,128]{1,0:T(1,128)}', space=vmem, size = 0x12000, scoped, tag = 'internal scratch']
  %s0 = inlined_call_operand.vmem [shape: f32[24,59], index: 0, kind: input, shape index: {}]
  %s1 = inlined_call_operand.vmem [shape: bf16[59,128], index: 1, kind: input, shape index: {}]
  %s2 = inlined_call_operand.vmem [shape: bf16[5,128,128], index: 2, kind: input, shape index: {}]
  %s3 = inlined_call_operand.vmem [shape: f32[6,1,128], index: 3, kind: input, shape index: {}]
  %s4 = inlined_call_operand.vmem [shape: bf16[24,128], index: 4, kind: output, shape index: {}]
  %s5 = sld [smem:[#allocation0]]
  $region93: #{dnn3_feature_forward.1} parent=0
    _
  %s7 = ssub.s32 1, %s5
  %s8 = scalar_select 0, %s7, %s5
  $region1: #{dnn3_feature_forward.1} parent=0
    #allocation2 [shape = 'u8[8192]{0}', space=vmem, size = 0x2000, scoped, tag = 'output window, operand 0']
    loop: start=0, step=1, limit=4
    $region2: #{dnn3_feature_forward.1} parent=1 // loop_pre_header
      _
    $region3: #{dnn3_feature_forward.1} parent=1 // loop_header
      %s10 = sphi 0, %s14
      %p11 = scmp.ge.s32.totalorder %s10, 4
      %s20 = sphi 0, %s22
      %s23 = sphi 0, %s20
      %s24 = sphi 0, %s23
      %s40 = sphi 0, %s24
      %s44 = sphi 0, %s44
      %s46 = sphi 0, %s44
      %s47 = sphi 0, %s46
      %s61 = sphi 0, %s47
      %s65 = sphi 0, %s65
      %s67 = sphi 0, %s65
      %s68 = sphi 0, %s67
      %s82 = sphi 0, %s68
      %s86 = sphi 0, %s86
      %s88 = sphi 0, %s86
      %s89 = sphi 0, %s88
      %s103 = sphi 0, %s89
      %s109 = sphi 0, %s111
      %s112 = sphi 0, %s109
      %s113 = sphi 0, %s112
      %s129 = sphi 0, %s113
    $region4: #{dnn3_feature_forward.1} parent=1 // loop_header_branch
      %13 = sbr.rel (%p11) target = $region8
    $region5: #{dnn3_feature_forward.1} parent=1 // loop_body
      %s15 = ssub.s32 %s10, 1
      %s16 = ssub.s32 %s10, 2
      %s17 = sadd.s32 %s10, 1
      %s18 = ssub.s32 %s10, %s17
      %p19 = scmp.eq.s32.totalorder %s18, 0
      %s21 = sadd.s32 %s20, 1
      %s22 = scalar_select %p19, %s20, %s21
      %p25 = pneg %p19
      %p26 = scmp.eq.s32.totalorder %s10, 1
      %p27 = por %p25, %p26
      %p28 = scmp.ne.s32.totalorder %s20, %s23
      %p29 = scmp.eq.s32.totalorder %s10, 0
      %p30 = por %p28, %p29
      %p31 = scmp.ne.s32.totalorder %s20, %s23
      %p32 = scmp.eq.s32.totalorder %s15, 1
      %p33 = por %p31, %p32
      %p34 = scmp.ne.s32.totalorder %s23, %s24
      %p35 = scmp.eq.s32.totalorder %s15, 0
      %p36 = por %p34, %p35
      %p37 = scmp.ne.s32.totalorder %s23, %s24
      %p38 = scmp.eq.s32.totalorder %s16, 1
      %p39 = por %p37, %p38
      %p41 = scmp.ne.s32.totalorder %s24, %s40
      %p42 = scmp.eq.s32.totalorder %s16, 0
      %p43 = por %p41, %p42
      %s45 = sadd.s32 %s44, 1
      %p48 = scmp.eq.s32.totalorder %s10, 1
      %p49 = scmp.ne.s32.totalorder %s44, %s46
      %p50 = scmp.eq.s32.totalorder %s10, 0
      %p51 = por %p49, %p50
      %p52 = scmp.ne.s32.totalorder %s44, %s46
      %p53 = scmp.eq.s32.totalorder %s15, 1
      %p54 = por %p52, %p53
      %p55 = scmp.ne.s32.totalorder %s46, %s47
      %p56 = scmp.eq.s32.totalorder %s15, 0
      %p57 = por %p55, %p56
      %p58 = scmp.ne.s32.totalorder %s46, %s47
      %p59 = scmp.eq.s32.totalorder %s16, 1
      %p60 = por %p58, %p59
      %p62 = scmp.ne.s32.totalorder %s47, %s61
      %p63 = scmp.eq.s32.totalorder %s16, 0
      %p64 = por %p62, %p63
      %s66 = sadd.s32 %s65, 1
      %p69 = scmp.eq.s32.totalorder %s10, 1
      %p70 = scmp.ne.s32.totalorder %s65, %s67
      %p71 = scmp.eq.s32.totalorder %s10, 0
      %p72 = por %p70, %p71
      %p73 = scmp.ne.s32.totalorder %s65, %s67
      %p74 = scmp.eq.s32.totalorder %s15, 1
      %p75 = por %p73, %p74
      %p76 = scmp.ne.s32.totalorder %s67, %s68
      %p77 = scmp.eq.s32.totalorder %s15, 0
      %p78 = por %p76, %p77
      %p79 = scmp.ne.s32.totalorder %s67, %s68
      %p80 = scmp.eq.s32.totalorder %s16, 1
      %p81 = por %p79, %p80
      %p83 = scmp.ne.s32.totalorder %s68, %s82
      %p84 = scmp.eq.s32.totalorder %s16, 0
      %p85 = por %p83, %p84
      %s87 = sadd.s32 %s86, 1
      %p90 = scmp.eq.s32.totalorder %s10, 1
      %p91 = scmp.ne.s32.totalorder %s86, %s88
      %p92 = scmp.eq.s32.totalorder %s10, 0
      %p93 = por %p91, %p92
      %p94 = scmp.ne.s32.totalorder %s86, %s88
      %p95 = scmp.eq.s32.totalorder %s15, 1
      %p96 = por %p94, %p95
      %p97 = scmp.ne.s32.totalorder %s88, %s89
      %p98 = scmp.eq.s32.totalorder %s15, 0
      %p99 = por %p97, %p98
      %p100 = scmp.ne.s32.totalorder %s88, %s89
      %p101 = scmp.eq.s32.totalorder %s16, 1
      %p102 = por %p100, %p101
      %p104 = scmp.ne.s32.totalorder %s89, %s103
      %p105 = scmp.eq.s32.totalorder %s16, 0
      %p106 = por %p104, %p105
      %s107 = ssub.s32 %s10, %s17
      %p108 = scmp.eq.s32.totalorder %s107, 0
      %s110 = sadd.s32 %s109, 1
      %s111 = scalar_select %p108, %s109, %s110
      %p114 = pneg %p108
      %p115 = scmp.eq.s32.totalorder %s10, 1
      %p116 = por %p114, %p115
      %p117 = scmp.ne.s32.totalorder %s109, %s112
      %p118 = scmp.eq.s32.totalorder %s10, 0
      %p119 = por %p117, %p118
      %p120 = scmp.ne.s32.totalorder %s109, %s112
      %p121 = scmp.eq.s32.totalorder %s15, 1
      %p122 = por %p120, %p121
      %p123 = scmp.ne.s32.totalorder %s112, %s113
      %p124 = scmp.eq.s32.totalorder %s15, 0
      %p125 = por %p123, %p124
      %p126 = scmp.ne.s32.totalorder %s112, %s113
      %p127 = scmp.eq.s32.totalorder %s16, 1
      %p128 = por %p126, %p127
      %p130 = scmp.ne.s32.totalorder %s113, %s129
      %p131 = scmp.eq.s32.totalorder %s16, 0
      %p132 = por %p130, %p131
      %p133 = scmp.le.s32.totalorder 1, %s10
      %p134 = scmp.lt.s32.totalorder %s10, 3
      %p135 = pnand %p133, %p134
      %p136 = pneg %p135
      // Predicated region
      $region9: #{dnn3_feature_forward.1} parent=5 // pred_check
        _
      $region10: #{dnn3_feature_forward.1} parent=5 // pred_check_branch
        %138 = sbr.rel (%p135) target = $region12
      $region11: #{dnn3_feature_forward.1} parent=5 // pred_region
        %s139 = ssub.s32 %s10, 1
        // Predicated region
        $region13: #{dnn3_feature_forward.1} parent=11 // pred_check
          %p140 = pneg %p57
        $region14: #{dnn3_feature_forward.1} parent=11 // pred_check_branch
          %142 = sbr.rel (%p140) target = $region16
        $region15: #{dnn3_feature_forward.1} parent=11 // pred_region
          _
        $region16: #{dnn3_feature_forward.1} parent=11 // pred_fallthru
          _
        // Predicated region
        $region17: #{dnn3_feature_forward.1} parent=11 // pred_check
          %p143 = pneg %p78
        $region18: #{dnn3_feature_forward.1} parent=11 // pred_check_branch
          %145 = sbr.rel (%p143) target = $region20
        $region19: #{dnn3_feature_forward.1} parent=11 // pred_region
          _
        $region20: #{dnn3_feature_forward.1} parent=11 // pred_fallthru
          _
        // Predicated region
        $region21: #{dnn3_feature_forward.1} parent=11 // pred_check
          %p146 = pneg %p99
        $region22: #{dnn3_feature_forward.1} parent=11 // pred_check_branch
          %148 = sbr.rel (%p146) target = $region24
        $region23: #{dnn3_feature_forward.1} parent=11 // pred_region
          _
        $region24: #{dnn3_feature_forward.1} parent=11 // pred_fallthru
          _
      $region12: #{dnn3_feature_forward.1} parent=5 // pred_fallthru
        _
      %p149 = scmp.lt.s32.totalorder %s10, 2
      // Predicated region
      $region25: #{dnn3_feature_forward.1} parent=5 // pred_check
        %p150 = pneg %p149
      $region26: #{dnn3_feature_forward.1} parent=5 // pred_check_branch
        %152 = sbr.rel (%p150) target = $region28
      $region27: #{dnn3_feature_forward.1} parent=5 // pred_region
        // Predicated region
        $region29: #{dnn3_feature_forward.1} parent=27 // pred_check
          %p153 = pneg %p30
        $region30: #{dnn3_feature_forward.1} parent=27 // pred_check_branch
          %155 = sbr.rel (%p153) target = $region32
        $region31: #{dnn3_feature_forward.1} parent=27 // pred_region
          %s156 = smul.u32 2, %s10
          %s157 = ssub.s32 3, %s156
          %p158 = scmp.lt.s32.totalorder %s157, 2
          %s159 = scalar_select %p158, %s157, 2
          %s160 = smul.u32 128, %s159
          %p161 = scmp.lt.s32.totalorder %s156, 2
          %s162 = scalar_select %p161, %s156, 2
          %s163 = smul.addr %s162, 8
          %s164 = scalar_lea.vmem %s0, %s163
          %s165 = smul.u32 2, %s10
          %s166 = ssub.s32 3, %s165
          %p167 = scmp.lt.s32.totalorder %s166, 2
          %s168 = scalar_select %p167, %s166, 2
          %s169 = smul.u32 128, %s168
        $region32: #{dnn3_feature_forward.1} parent=27 // pred_fallthru
          _
      $region28: #{dnn3_feature_forward.1} parent=5 // pred_fallthru
        _
      %p170 = scmp.le.s32.totalorder 1, %s10
      %p171 = scmp.lt.s32.totalorder %s10, 3
      %p172 = pnand %p170, %p171
      %p173 = pneg %p172
      // Predicated region
      $region33: #{dnn3_feature_forward.1} parent=5 // pred_check
        _
      $region34: #{dnn3_feature_forward.1} parent=5 // pred_check_branch
        %175 = sbr.rel (%p172) target = $region36
      $region35: #{dnn3_feature_forward.1} parent=5 // pred_region
        %s176 = ssub.s32 %s10, 1
        %s177 = smul.u32 2, %s15
        %s178 = ssub.s32 3, %s177
        %p179 = scmp.lt.s32.totalorder %s178, 2
        %s180 = scalar_select %p179, %s178, 2
        %s181 = smul.u32 128, %s180
        %p182 = scmp.lt.s32.totalorder %s177, 2
        %s183 = scalar_select %p182, %s177, 2
        %s184 = smul.addr %s183, 8
        %s185 = scalar_lea.vmem %s0, %s184
        %p186 = pneg %p36
        %p187 = pneg %p33
        %p188 = pneg %p57
        %p189 = pneg %p54
        %p190 = pneg %p78
        %p191 = pneg %p75
        %p192 = pneg %p99
        %p193 = pneg %p96
        %p194 = pneg %p125
        %p195 = pneg %p122
        %s196 = sand.u32 %s112, 1
        %s197 = sand.u32 %s112, 1
        %s198 = smul.addr %s197, 8
        %s199 = scalar_lea.vmem [#allocation2], %s198
        %s200 = smul.u32 2, %s15
        %s201 = ssub.s32 3, %s200
        %p202 = scmp.lt.s32.totalorder %s201, 2
        %s203 = scalar_select %p202, %s201, 2
        %s204 = smul.u32 128, %s203
        %p205 = scmp.lt.s32.totalorder %s200, 2
        %s206 = scalar_select %p205, %s200, 2
        %s207 = smul.addr %s206, 8
        %s208 = scalar_lea.vmem %s0, %s207
        %s209 = smul.u32 2, %s15
        %s210 = ssub.s32 3, %s209
        %p211 = scmp.lt.s32.totalorder %s210, 2
        %s212 = scalar_select %p211, %s210, 2
        %s213 = smul.u32 128, %s212
        %s214 = smul.u32 2, %s15
        %s215 = ssub.s32 3, %s214
        %p216 = scmp.lt.s32.totalorder %s215, 2
        %s217 = scalar_select %p216, %s215, 2
        %s218 = smul.u32 64, %s217
        %v220 = vld [vmem:[%s208] sm:$0xff]
        %v221 = vld [vmem:[%s208 + $0x8] sm:$0xff]
        %v222 = vpack.c.bf16 %v221, %v220
        %v223 = vld [vmem:[%s1] sm:$0xf]
        %v224 = vld [vmem:[%s1 + $0x4] sm:$0xf]
        %v225 = vld [vmem:[%s1 + $0x8] sm:$0xf]
        %v226 = vld [vmem:[%s1 + $0xc] sm:$0xf]
        %v227 = vld [vmem:[%s1 + $0x10] sm:$0xf]
        %v228 = vld [vmem:[%s1 + $0x14] sm:$0xf]
        %v229 = vld [vmem:[%s1 + $0x18] sm:$0xf]
        %v230 = vld [vmem:[%s1 + $0x1c] sm:$0x3]
        %v231 = vld [vmem:[%s3] sm:$0x1]
        %v233 = vlaneseq
        %v234 = vshrl.u32 %v233, 7
        %v235 = vsub.s32 0, %v234
        %v236 = vrot.slane %v231, %v235
        %v246 = vunpack.c.l.b16 %v223
        %v247 = vunpack.c.l.b16 %v224
        %v248 = vunpack.c.l.b16 %v225
        %v249 = vunpack.c.l.b16 %v226
        %v250 = vunpack.c.l.b16 %v227
        %v251 = vunpack.c.l.b16 %v228
        %v252 = vunpack.c.l.b16 %v229
        %v253 = vunpack.c.l.b16 %v230
        %v254 = vpack.c.b16 %v247, %v246
        %v255 = vpack.c.b16 %v249, %v248
        %v256 = vpack.c.b16 %v251, %v250
        %v257 = vpack.c.b16 %v253, %v252
        %vm261 = vcmask 482304
        %v263 = vsel %vm261, %v222, 0
        %vm265 = vcmask 1044480
        %vm266 = vcmask 1045504
        %v267 = vsel %vm265, 4294967295, 65535
        %v268 = vsel %vm266, %v267, 0
        %v270 = vand.u32 %v257, %v268
        %272 = vmatprep.subr.bf16.mxu0 0
        %273 = vmatpush1.bf16.msra.mxu0 %v254
        %274 = vmatprep.subr.bf16.mxu0 0
        %275 = vmatpush1.bf16.msra.mxu0 %v255
        %276 = vmatprep.subr.bf16.mxu0 0
        %277 = vmatpush1.bf16.msra.mxu0 %v256
        %278 = vmatprep.subr.bf16.mxu0 0
        %279 = vmatpush1.bf16.msra.mxu0 %v270
        %280 = vmatprep.subr.bf16.mxu0 0
        %281 = vmatpush1.bf16.msra.mxu0 0
        %282 = vmatprep.subr.bf16.mxu0 0
        %283 = vmatpush1.bf16.msra.mxu0 0
        %284 = vmatprep.subr.bf16.mxu0 0
        %285 = vmatpush1.bf16.msra.mxu0 0
        %286 = vmatprep.subr.bf16.mxu0 0
        %287 = vmatpush1.bf16.msra.mxu0 0
        %288 = vmatprep.subr.bf16.mxu0 0
        %289 = vmatpush1.bf16.msra.mxu0 0
        %290 = vmatprep.subr.bf16.mxu0 0
        %291 = vmatpush1.bf16.msra.mxu0 0
        %292 = vmatprep.subr.bf16.mxu0 0
        %293 = vmatpush1.bf16.msra.mxu0 0
        %294 = vmatprep.subr.bf16.mxu0 0
        %295 = vmatpush1.bf16.msra.mxu0 0
        %296 = vmatprep.subr.bf16.mxu0 0
        %297 = vmatpush1.bf16.msra.mxu0 0
        %298 = vmatprep.subr.bf16.mxu0 0
        %299 = vmatpush1.bf16.msra.mxu0 0
        %300 = vmatprep.subr.bf16.mxu0 0
        %301 = vmatpush1.bf16.msra.mxu0 0
        %302 = vmatprep.subr.bf16.mxu0 0
        %303 = vmatpush1.bf16.msra.mxu0 0
        %304 = vmatprep.mubr.bf16.mxu0 0
        %305 = vmatmul.mubr.bf16.gmra.mrb[0].mxu0 %v263
        %v306 = vpop.f32.mrb[0].mxu0
        %v307 = vadd.f32 %v236, %v306
        %v308 = vpop.f32.mrb[0].mxu0
        %v309 = vpop.f32.mrb[0].mxu0
        %v310 = vadd.f32 %v236, %v309
        %v311 = vpop.f32.mrb[0].mxu0
        %312 = vdwg.mxu0
        %vm313 = vcmp.gt.f32.partialorder %v307, 0.0
        %vm314 = vcmp.gt.f32.partialorder %v310, 0.0
        %v315 = vmul.f32 %v307, 0.01
        %v316 = vmul.f32 %v310, 0.01
        %v317 = vsel %vm313, %v307, %v315
        %v318 = vsel %vm314, %v310, %v316
        %v319 = vpack.c.bf16 %v318, %v317
        %v320 = vld [vmem:[%s2] sm:$0xf]
        %v321 = vld [vmem:[%s2 + $0x4] sm:$0xf]
        %v322 = vld [vmem:[%s2 + $0x8] sm:$0xf]
        %v323 = vld [vmem:[%s2 + $0xc] sm:$0xf]
        %v324 = vld [vmem:[%s2 + $0x10] sm:$0xf]
        %v325 = vld [vmem:[%s2 + $0x14] sm:$0xf]
        %v326 = vld [vmem:[%s2 + $0x18] sm:$0xf]
        %v327 = vld [vmem:[%s2 + $0x1c] sm:$0xf]
        %v328 = vld [vmem:[%s2 + $0x20] sm:$0xf]
        %v329 = vld [vmem:[%s2 + $0x24] sm:$0xf]
        %v330 = vld [vmem:[%s2 + $0x28] sm:$0xf]
        %v331 = vld [vmem:[%s2 + $0x2c] sm:$0xf]
        %v332 = vld [vmem:[%s2 + $0x30] sm:$0xf]
        %v333 = vld [vmem:[%s2 + $0x34] sm:$0xf]
        %v334 = vld [vmem:[%s2 + $0x38] sm:$0xf]
        %v335 = vld [vmem:[%s2 + $0x3c] sm:$0xf]
        %s336 = scalar_lea.vmem %s3, 1
        %v337 = vld [vmem:[%s336] sm:$0x1]
        %v339 = vlaneseq
        %v340 = vshrl.u32 %v339, 7
        %v341 = vsub.s32 0, %v340
        %v342 = vrot.slane %v337, %v341
        %v360 = vunpack.c.l.b16 %v320
        %v361 = vunpack.c.l.b16 %v321
        %v362 = vunpack.c.l.b16 %v322
        %v363 = vunpack.c.l.b16 %v323
        %v364 = vunpack.c.l.b16 %v324
        %v365 = vunpack.c.l.b16 %v325
        %v366 = vunpack.c.l.b16 %v326
        %v367 = vunpack.c.l.b16 %v327
        %v368 = vunpack.c.l.b16 %v328
        %v369 = vunpack.c.l.b16 %v329
        %v370 = vunpack.c.l.b16 %v330
        %v371 = vunpack.c.l.b16 %v331
        %v372 = vunpack.c.l.b16 %v332
        %v373 = vunpack.c.l.b16 %v333
        %v374 = vunpack.c.l.b16 %v334
        %v375 = vunpack.c.l.b16 %v335
        %v376 = vpack.c.b16 %v361, %v360
        %v377 = vpack.c.b16 %v363, %v362
        %v378 = vpack.c.b16 %v365, %v364
        %v379 = vpack.c.b16 %v367, %v366
        %v380 = vpack.c.b16 %v369, %v368
        %v381 = vpack.c.b16 %v371, %v370
        %v382 = vpack.c.b16 %v373, %v372
        %v383 = vpack.c.b16 %v375, %v374
        %392 = vmatprep.subr.bf16.mxu0 0
        %393 = vmatpush1.bf16.msra.mxu0 %v376
        %394 = vmatprep.subr.bf16.mxu0 0
        %395 = vmatpush1.bf16.msra.mxu0 %v377
        %396 = vmatprep.subr.bf16.mxu0 0
        %397 = vmatpush1.bf16.msra.mxu0 %v378
        %398 = vmatprep.subr.bf16.mxu0 0
        %399 = vmatpush1.bf16.msra.mxu0 %v379
        %400 = vmatprep.subr.bf16.mxu0 0
        %401 = vmatpush1.bf16.msra.mxu0 %v380
        %402 = vmatprep.subr.bf16.mxu0 0
        %403 = vmatpush1.bf16.msra.mxu0 %v381
        %404 = vmatprep.subr.bf16.mxu0 0
        %405 = vmatpush1.bf16.msra.mxu0 %v382
        %406 = vmatprep.subr.bf16.mxu0 0
        %407 = vmatpush1.bf16.msra.mxu0 %v383
        %408 = vmatprep.subr.bf16.mxu0 0
        %409 = vmatpush1.bf16.msra.mxu0 0
        %410 = vmatprep.subr.bf16.mxu0 0
        %411 = vmatpush1.bf16.msra.mxu0 0
        %412 = vmatprep.subr.bf16.mxu0 0
        %413 = vmatpush1.bf16.msra.mxu0 0
        %414 = vmatprep.subr.bf16.mxu0 0
        %415 = vmatpush1.bf16.msra.mxu0 0
        %416 = vmatprep.subr.bf16.mxu0 0
        %417 = vmatpush1.bf16.msra.mxu0 0
        %418 = vmatprep.subr.bf16.mxu0 0
        %419 = vmatpush1.bf16.msra.mxu0 0
        %420 = vmatprep.subr.bf16.mxu0 0
        %421 = vmatpush1.bf16.msra.mxu0 0
        %422 = vmatprep.subr.bf16.mxu0 0
        %423 = vmatpush1.bf16.msra.mxu0 0
        %424 = vmatprep.mubr.bf16.mxu0 0
        %425 = vmatmul.mubr.bf16.gmra.mrb[0].mxu0 %v319
        %v426 = vpop.f32.mrb[0].mxu0
        %v427 = vadd.f32 %v342, %v426
        %v428 = vpop.f32.mrb[0].mxu0
        %v429 = vpop.f32.mrb[0].mxu0
        %v430 = vadd.f32 %v342, %v429
        %v431 = vpop.f32.mrb[0].mxu0
        %432 = vdwg.mxu0
        %vm433 = vcmp.gt.f32.partialorder %v427, 0.0
        %vm434 = vcmp.gt.f32.partialorder %v430, 0.0
        %v435 = vmul.f32 %v427, 0.01
        %v436 = vmul.f32 %v430, 0.01
        %v437 = vsel %vm433, %v427, %v435
        %v438 = vsel %vm434, %v430, %v436
        %v439 = vpack.c.bf16 %v438, %v437
        %s440 = scalar_lea.vmem %s2, 64
        %v441 = vld [vmem:[%s440] sm:$0xf]
        %v442 = vld [vmem:[%s440 + $0x4] sm:$0xf]
        %v443 = vld [vmem:[%s440 + $0x8] sm:$0xf]
        %v444 = vld [vmem:[%s440 + $0xc] sm:$0xf]
        %v445 = vld [vmem:[%s440 + $0x10] sm:$0xf]
        %v446 = vld [vmem:[%s440 + $0x14] sm:$0xf]
        %v447 = vld [vmem:[%s440 + $0x18] sm:$0xf]
        %v448 = vld [vmem:[%s440 + $0x1c] sm:$0xf]
        %v449 = vld [vmem:[%s440 + $0x20] sm:$0xf]
        %v450 = vld [vmem:[%s440 + $0x24] sm:$0xf]
        %v451 = vld [vmem:[%s440 + $0x28] sm:$0xf]
        %v452 = vld [vmem:[%s440 + $0x2c] sm:$0xf]
        %v453 = vld [vmem:[%s440 + $0x30] sm:$0xf]
        %v454 = vld [vmem:[%s440 + $0x34] sm:$0xf]
        %v455 = vld [vmem:[%s440 + $0x38] sm:$0xf]
        %v456 = vld [vmem:[%s440 + $0x3c] sm:$0xf]
        %s457 = scalar_lea.vmem %s3, 2
        %v458 = vld [vmem:[%s457] sm:$0x1]
        %v460 = vlaneseq
        %v461 = vshrl.u32 %v460, 7
        %v462 = vsub.s32 0, %v461
        %v463 = vrot.slane %v458, %v462
        %v481 = vunpack.c.l.b16 %v441
        %v482 = vunpack.c.l.b16 %v442
        %v483 = vunpack.c.l.b16 %v443
        %v484 = vunpack.c.l.b16 %v444
        %v485 = vunpack.c.l.b16 %v445
        %v486 = vunpack.c.l.b16 %v446
        %v487 = vunpack.c.l.b16 %v447
        %v488 = vunpack.c.l.b16 %v448
        %v489 = vunpack.c.l.b16 %v449
        %v490 = vunpack.c.l.b16 %v450
        %v491 = vunpack.c.l.b16 %v451
        %v492 = vunpack.c.l.b16 %v452
        %v493 = vunpack.c.l.b16 %v453
        %v494 = vunpack.c.l.b16 %v454
        %v495 = vunpack.c.l.b16 %v455
        %v496 = vunpack.c.l.b16 %v456
        %v497 = vpack.c.b16 %v482, %v481
        %v498 = vpack.c.b16 %v484, %v483
        %v499 = vpack.c.b16 %v486, %v485
        %v500 = vpack.c.b16 %v488, %v487
        %v501 = vpack.c.b16 %v490, %v489
        %v502 = vpack.c.b16 %v492, %v491
        %v503 = vpack.c.b16 %v494, %v493
        %v504 = vpack.c.b16 %v496, %v495
        %513 = vmatprep.subr.bf16.mxu0 0
        %514 = vmatpush1.bf16.msra.mxu0 %v497
        %515 = vmatprep.subr.bf16.mxu0 0
        %516 = vmatpush1.bf16.msra.mxu0 %v498
        %517 = vmatprep.subr.bf16.mxu0 0
        %518 = vmatpush1.bf16.msra.mxu0 %v499
        %519 = vmatprep.subr.bf16.mxu0 0
        %520 = vmatpush1.bf16.msra.mxu0 %v500
        %521 = vmatprep.subr.bf16.mxu0 0
        %522 = vmatpush1.bf16.msra.mxu0 %v501
        %523 = vmatprep.subr.bf16.mxu0 0
        %524 = vmatpush1.bf16.msra.mxu0 %v502
        %525 = vmatprep.subr.bf16.mxu0 0
        %526 = vmatpush1.bf16.msra.mxu0 %v503
        %527 = vmatprep.subr.bf16.mxu0 0
        %528 = vmatpush1.bf16.msra.mxu0 %v504
        %529 = vmatprep.subr.bf16.mxu0 0
        %530 = vmatpush1.bf16.msra.mxu0 0
        %531 = vmatprep.subr.bf16.mxu0 0
        %532 = vmatpush1.bf16.msra.mxu0 0
        %533 = vmatprep.subr.bf16.mxu0 0
        %534 = vmatpush1.bf16.msra.mxu0 0
        %535 = vmatprep.subr.bf16.mxu0 0
        %536 = vmatpush1.bf16.msra.mxu0 0
        %537 = vmatprep.subr.bf16.mxu0 0
        %538 = vmatpush1.bf16.msra.mxu0 0
        %539 = vmatprep.subr.bf16.mxu0 0
        %540 = vmatpush1.bf16.msra.mxu0 0
        %541 = vmatprep.subr.bf16.mxu0 0
        %542 = vmatpush1.bf16.msra.mxu0 0
        %543 = vmatprep.subr.bf16.mxu0 0
        %544 = vmatpush1.bf16.msra.mxu0 0
        %545 = vmatprep.mubr.bf16.mxu0 0
        %546 = vmatmul.mubr.bf16.gmra.mrb[0].mxu0 %v439
        %v547 = vpop.f32.mrb[0].mxu0
        %v548 = vadd.f32 %v463, %v547
        %v549 = vpop.f32.mrb[0].mxu0
        %v550 = vpop.f32.mrb[0].mxu0
        %v551 = vadd.f32 %v463, %v550
        %v552 = vpop.f32.mrb[0].mxu0
        %553 = vdwg.mxu0
        %vm554 = vcmp.gt.f32.partialorder %v548, 0.0
        %vm555 = vcmp.gt.f32.partialorder %v551, 0.0
        %v556 = vmul.f32 %v548, 0.01
        %v557 = vmul.f32 %v551, 0.01
        %v558 = vsel %vm554, %v548, %v556
        %v559 = vsel %vm555, %v551, %v557
        %v560 = vpack.c.bf16 %v559, %v558
        %s561 = scalar_lea.vmem %s2, 128
        %v562 = vld [vmem:[%s561] sm:$0xf]
        %v563 = vld [vmem:[%s561 + $0x4] sm:$0xf]
        %v564 = vld [vmem:[%s561 + $0x8] sm:$0xf]
        %v565 = vld [vmem:[%s561 + $0xc] sm:$0xf]
        %v566 = vld [vmem:[%s561 + $0x10] sm:$0xf]
        %v567 = vld [vmem:[%s561 + $0x14] sm:$0xf]
        %v568 = vld [vmem:[%s561 + $0x18] sm:$0xf]
        %v569 = vld [vmem:[%s561 + $0x1c] sm:$0xf]
        %v570 = vld [vmem:[%s561 + $0x20] sm:$0xf]
        %v571 = vld [vmem:[%s561 + $0x24] sm:$0xf]
        %v572 = vld [vmem:[%s561 + $0x28] sm:$0xf]
        %v573 = vld [vmem:[%s561 + $0x2c] sm:$0xf]
        %v574 = vld [vmem:[%s561 + $0x30] sm:$0xf]
        %v575 = vld [vmem:[%s561 + $0x34] sm:$0xf]
        %v576 = vld [vmem:[%s561 + $0x38] sm:$0xf]
        %v577 = vld [vmem:[%s561 + $0x3c] sm:$0xf]
        %s578 = scalar_lea.vmem %s3, 3
        %v579 = vld [vmem:[%s578] sm:$0x1]
        %v581 = vlaneseq
        %v582 = vshrl.u32 %v581, 7
        %v583 = vsub.s32 0, %v582
        %v584 = vrot.slane %v579, %v583
        %v602 = vunpack.c.l.b16 %v562
        %v603 = vunpack.c.l.b16 %v563
        %v604 = vunpack.c.l.b16 %v564
        %v605 = vunpack.c.l.b16 %v565
        %v606 = vunpack.c.l.b16 %v566
        %v607 = vunpack.c.l.b16 %v567
        %v608 = vunpack.c.l.b16 %v568
        %v609 = vunpack.c.l.b16 %v569
        %v610 = vunpack.c.l.b16 %v570
        %v611 = vunpack.c.l.b16 %v571
        %v612 = vunpack.c.l.b16 %v572
        %v613 = vunpack.c.l.b16 %v573
        %v614 = vunpack.c.l.b16 %v574
        %v615 = vunpack.c.l.b16 %v575
        %v616 = vunpack.c.l.b16 %v576
        %v617 = vunpack.c.l.b16 %v577
        %v618 = vpack.c.b16 %v603, %v602
        %v619 = vpack.c.b16 %v605, %v604
        %v620 = vpack.c.b16 %v607, %v606
        %v621 = vpack.c.b16 %v609, %v608
        %v622 = vpack.c.b16 %v611, %v610
        %v623 = vpack.c.b16 %v613, %v612
        %v624 = vpack.c.b16 %v615, %v614
        %v625 = vpack.c.b16 %v617, %v616
        %634 = vmatprep.subr.bf16.mxu0 0
        %635 = vmatpush1.bf16.msra.mxu0 %v618
        %636 = vmatprep.subr.bf16.mxu0 0
        %637 = vmatpush1.bf16.msra.mxu0 %v619
        %638 = vmatprep.subr.bf16.mxu0 0
        %639 = vmatpush1.bf16.msra.mxu0 %v620
        %640 = vmatprep.subr.bf16.mxu0 0
        %641 = vmatpush1.bf16.msra.mxu0 %v621
        %642 = vmatprep.subr.bf16.mxu0 0
        %643 = vmatpush1.bf16.msra.mxu0 %v622
        %644 = vmatprep.subr.bf16.mxu0 0
        %645 = vmatpush1.bf16.msra.mxu0 %v623
        %646 = vmatprep.subr.bf16.mxu0 0
        %647 = vmatpush1.bf16.msra.mxu0 %v624
        %648 = vmatprep.subr.bf16.mxu0 0
        %649 = vmatpush1.bf16.msra.mxu0 %v625
        %650 = vmatprep.subr.bf16.mxu0 0
        %651 = vmatpush1.bf16.msra.mxu0 0
        %652 = vmatprep.subr.bf16.mxu0 0
        %653 = vmatpush1.bf16.msra.mxu0 0
        %654 = vmatprep.subr.bf16.mxu0 0
        %655 = vmatpush1.bf16.msra.mxu0 0
        %656 = vmatprep.subr.bf16.mxu0 0
        %657 = vmatpush1.bf16.msra.mxu0 0
        %658 = vmatprep.subr.bf16.mxu0 0
        %659 = vmatpush1.bf16.msra.mxu0 0
        %660 = vmatprep.subr.bf16.mxu0 0
        %661 = vmatpush1.bf16.msra.mxu0 0
        %662 = vmatprep.subr.bf16.mxu0 0
        %663 = vmatpush1.bf16.msra.mxu0 0
        %664 = vmatprep.subr.bf16.mxu0 0
        %665 = vmatpush1.bf16.msra.mxu0 0
        %666 = vmatprep.mubr.bf16.mxu0 0
        %667 = vmatmul.mubr.bf16.gmra.mrb[0].mxu0 %v560
        %v668 = vpop.f32.mrb[0].mxu0
        %v669 = vadd.f32 %v584, %v668
        %v670 = vpop.f32.mrb[0].mxu0
        %v671 = vpop.f32.mrb[0].mxu0
        %v672 = vadd.f32 %v584, %v671
        %v673 = vpop.f32.mrb[0].mxu0
        %674 = vdwg.mxu0
        %vm675 = vcmp.gt.f32.partialorder %v669, 0.0
        %vm676 = vcmp.gt.f32.partialorder %v672, 0.0
        %v677 = vmul.f32 %v669, 0.01
        %v678 = vmul.f32 %v672, 0.01
        %v679 = vsel %vm675, %v669, %v677
        %v680 = vsel %vm676, %v672, %v678
        %v681 = vpack.c.bf16 %v680, %v679
        %s682 = scalar_lea.vmem %s2, 192
        %v683 = vld [vmem:[%s682] sm:$0xf]
        %v684 = vld [vmem:[%s682 + $0x4] sm:$0xf]
        %v685 = vld [vmem:[%s682 + $0x8] sm:$0xf]
        %v686 = vld [vmem:[%s682 + $0xc] sm:$0xf]
        %v687 = vld [vmem:[%s682 + $0x10] sm:$0xf]
        %v688 = vld [vmem:[%s682 + $0x14] sm:$0xf]
        %v689 = vld [vmem:[%s682 + $0x18] sm:$0xf]
        %v690 = vld [vmem:[%s682 + $0x1c] sm:$0xf]
        %v691 = vld [vmem:[%s682 + $0x20] sm:$0xf]
        %v692 = vld [vmem:[%s682 + $0x24] sm:$0xf]
        %v693 = vld [vmem:[%s682 + $0x28] sm:$0xf]
        %v694 = vld [vmem:[%s682 + $0x2c] sm:$0xf]
        %v695 = vld [vmem:[%s682 + $0x30] sm:$0xf]
        %v696 = vld [vmem:[%s682 + $0x34] sm:$0xf]
        %v697 = vld [vmem:[%s682 + $0x38] sm:$0xf]
        %v698 = vld [vmem:[%s682 + $0x3c] sm:$0xf]
        %s699 = scalar_lea.vmem %s3, 4
        %v700 = vld [vmem:[%s699] sm:$0x1]
        %v702 = vlaneseq
        %v703 = vshrl.u32 %v702, 7
        %v704 = vsub.s32 0, %v703
        %v705 = vrot.slane %v700, %v704
        %v723 = vunpack.c.l.b16 %v683
        %v724 = vunpack.c.l.b16 %v684
        %v725 = vunpack.c.l.b16 %v685
        %v726 = vunpack.c.l.b16 %v686
        %v727 = vunpack.c.l.b16 %v687
        %v728 = vunpack.c.l.b16 %v688
        %v729 = vunpack.c.l.b16 %v689
        %v730 = vunpack.c.l.b16 %v690
        %v731 = vunpack.c.l.b16 %v691
        %v732 = vunpack.c.l.b16 %v692
        %v733 = vunpack.c.l.b16 %v693
        %v734 = vunpack.c.l.b16 %v694
        %v735 = vunpack.c.l.b16 %v695
        %v736 = vunpack.c.l.b16 %v696
        %v737 = vunpack.c.l.b16 %v697
        %v738 = vunpack.c.l.b16 %v698
        %v739 = vpack.c.b16 %v724, %v723
        %v740 = vpack.c.b16 %v726, %v725
        %v741 = vpack.c.b16 %v728, %v727
        %v742 = vpack.c.b16 %v730, %v729
        %v743 = vpack.c.b16 %v732, %v731
        %v744 = vpack.c.b16 %v734, %v733
        %v745 = vpack.c.b16 %v736, %v735
        %v746 = vpack.c.b16 %v738, %v737
        %755 = vmatprep.subr.bf16.mxu0 0
        %756 = vmatpush1.bf16.msra.mxu0 %v739
        %757 = vmatprep.subr.bf16.mxu0 0
        %758 = vmatpush1.bf16.msra.mxu0 %v740
        %759 = vmatprep.subr.bf16.mxu0 0
        %760 = vmatpush1.bf16.msra.mxu0 %v741
        %761 = vmatprep.subr.bf16.mxu0 0
        %762 = vmatpush1.bf16.msra.mxu0 %v742
        %763 = vmatprep.subr.bf16.mxu0 0
        %764 = vmatpush1.bf16.msra.mxu0 %v743
        %765 = vmatprep.subr.bf16.mxu0 0
        %766 = vmatpush1.bf16.msra.mxu0 %v744
        %767 = vmatprep.subr.bf16.mxu0 0
        %768 = vmatpush1.bf16.msra.mxu0 %v745
        %769 = vmatprep.subr.bf16.mxu0 0
        %770 = vmatpush1.bf16.msra.mxu0 %v746
        %771 = vmatprep.subr.bf16.mxu0 0
        %772 = vmatpush1.bf16.msra.mxu0 0
        %773 = vmatprep.subr.bf16.mxu0 0
        %774 = vmatpush1.bf16.msra.mxu0 0
        %775 = vmatprep.subr.bf16.mxu0 0
        %776 = vmatpush1.bf16.msra.mxu0 0
        %777 = vmatprep.subr.bf16.mxu0 0
        %778 = vmatpush1.bf16.msra.mxu0 0
        %779 = vmatprep.subr.bf16.mxu0 0
        %780 = vmatpush1.bf16.msra.mxu0 0
        %781 = vmatprep.subr.bf16.mxu0 0
        %782 = vmatpush1.bf16.msra.mxu0 0
        %783 = vmatprep.subr.bf16.mxu0 0
        %784 = vmatpush1.bf16.msra.mxu0 0
        %785 = vmatprep.subr.bf16.mxu0 0
        %786 = vmatpush1.bf16.msra.mxu0 0
        %787 = vmatprep.mubr.bf16.mxu0 0
        %788 = vmatmul.mubr.bf16.gmra.mrb[0].mxu0 %v681
        %v789 = vpop.f32.mrb[0].mxu0
        %v790 = vadd.f32 %v705, %v789
        %v791 = vpop.f32.mrb[0].mxu0
        %v792 = vpop.f32.mrb[0].mxu0
        %v793 = vadd.f32 %v705, %v792
        %v794 = vpop.f32.mrb[0].mxu0
        %795 = vdwg.mxu0
        %vm796 = vcmp.gt.f32.partialorder %v790, 0.0
        %vm797 = vcmp.gt.f32.partialorder %v793, 0.0
        %v798 = vmul.f32 %v790, 0.01
        %v799 = vmul.f32 %v793, 0.01
        %v800 = vsel %vm796, %v790, %v798
        %v801 = vsel %vm797, %v793, %v799
        %v802 = vpack.c.bf16 %v801, %v800
        %s803 = scalar_lea.vmem %s2, 256
        %v804 = vld [vmem:[%s803] sm:$0xf]
        %v805 = vld [vmem:[%s803 + $0x4] sm:$0xf]
        %v806 = vld [vmem:[%s803 + $0x8] sm:$0xf]
        %v807 = vld [vmem:[%s803 + $0xc] sm:$0xf]
        %v808 = vld [vmem:[%s803 + $0x10] sm:$0xf]
        %v809 = vld [vmem:[%s803 + $0x14] sm:$0xf]
        %v810 = vld [vmem:[%s803 + $0x18] sm:$0xf]
        %v811 = vld [vmem:[%s803 + $0x1c] sm:$0xf]
        %v812 = vld [vmem:[%s803 + $0x20] sm:$0xf]
        %v813 = vld [vmem:[%s803 + $0x24] sm:$0xf]
        %v814 = vld [vmem:[%s803 + $0x28] sm:$0xf]
        %v815 = vld [vmem:[%s803 + $0x2c] sm:$0xf]
        %v816 = vld [vmem:[%s803 + $0x30] sm:$0xf]
        %v817 = vld [vmem:[%s803 + $0x34] sm:$0xf]
        %v818 = vld [vmem:[%s803 + $0x38] sm:$0xf]
        %v819 = vld [vmem:[%s803 + $0x3c] sm:$0xf]
        %s820 = scalar_lea.vmem %s3, 5
        %v821 = vld [vmem:[%s820] sm:$0x1]
        %v823 = vlaneseq
        %v824 = vshrl.u32 %v823, 7
        %v825 = vsub.s32 0, %v824
        %v826 = vrot.slane %v821, %v825
        %v844 = vunpack.c.l.b16 %v804
        %v845 = vunpack.c.l.b16 %v805
        %v846 = vunpack.c.l.b16 %v806
        %v847 = vunpack.c.l.b16 %v807
        %v848 = vunpack.c.l.b16 %v808
        %v849 = vunpack.c.l.b16 %v809
        %v850 = vunpack.c.l.b16 %v810
        %v851 = vunpack.c.l.b16 %v811
        %v852 = vunpack.c.l.b16 %v812
        %v853 = vunpack.c.l.b16 %v813
        %v854 = vunpack.c.l.b16 %v814
        %v855 = vunpack.c.l.b16 %v815
        %v856 = vunpack.c.l.b16 %v816
        %v857 = vunpack.c.l.b16 %v817
        %v858 = vunpack.c.l.b16 %v818
        %v859 = vunpack.c.l.b16 %v819
        %v860 = vpack.c.b16 %v845, %v844
        %v861 = vpack.c.b16 %v847, %v846
        %v862 = vpack.c.b16 %v849, %v848
        %v863 = vpack.c.b16 %v851, %v850
        %v864 = vpack.c.b16 %v853, %v852
        %v865 = vpack.c.b16 %v855, %v854
        %v866 = vpack.c.b16 %v857, %v856
        %v867 = vpack.c.b16 %v859, %v858
        %876 = vmatprep.subr.bf16.mxu0 0
        %877 = vmatpush1.bf16.msra.mxu0 %v860
        %878 = vmatprep.subr.bf16.mxu0 0
        %879 = vmatpush1.bf16.msra.mxu0 %v861
        %880 = vmatprep.subr.bf16.mxu0 0
        %881 = vmatpush1.bf16.msra.mxu0 %v862
        %882 = vmatprep.subr.bf16.mxu0 0
        %883 = vmatpush1.bf16.msra.mxu0 %v863
        %884 = vmatprep.subr.bf16.mxu0 0
        %885 = vmatpush1.bf16.msra.mxu0 %v864
        %886 = vmatprep.subr.bf16.mxu0 0
        %887 = vmatpush1.bf16.msra.mxu0 %v865
        %888 = vmatprep.subr.bf16.mxu0 0
        %889 = vmatpush1.bf16.msra.mxu0 %v866
        %890 = vmatprep.subr.bf16.mxu0 0
        %891 = vmatpush1.bf16.msra.mxu0 %v867
        %892 = vmatprep.subr.bf16.mxu0 0
        %893 = vmatpush1.bf16.msra.mxu0 0
        %894 = vmatprep.subr.bf16.mxu0 0
        %895 = vmatpush1.bf16.msra.mxu0 0
        %896 = vmatprep.subr.bf16.mxu0 0
        %897 = vmatpush1.bf16.msra.mxu0 0
        %898 = vmatprep.subr.bf16.mxu0 0
        %899 = vmatpush1.bf16.msra.mxu0 0
        %900 = vmatprep.subr.bf16.mxu0 0
        %901 = vmatpush1.bf16.msra.mxu0 0
        %902 = vmatprep.subr.bf16.mxu0 0
        %903 = vmatpush1.bf16.msra.mxu0 0
        %904 = vmatprep.subr.bf16.mxu0 0
        %905 = vmatpush1.bf16.msra.mxu0 0
        %906 = vmatprep.subr.bf16.mxu0 0
        %907 = vmatpush1.bf16.msra.mxu0 0
        %908 = vmatprep.mubr.bf16.mxu0 0
        %909 = vmatmul.mubr.bf16.gmra.mrb[0].mxu0 %v802
        %v910 = vpop.f32.mrb[0].mxu0
        %v911 = vadd.f32 %v826, %v910
        %v912 = vpop.f32.mrb[0].mxu0
        %v913 = vpop.f32.mrb[0].mxu0
        %v914 = vadd.f32 %v826, %v913
        %v915 = vpop.f32.mrb[0].mxu0
        %916 = vdwg.mxu0
        %v917 = vpack.c.bf16 %v914, %v911
        %v919 = vunpack.c.l.b16 %v917
        %v920 = vunpack.c.h.b16 %v917
        %v921 = vpack.c.b16 %v919, %v919
        %v922 = vpack.c.b16 %v920, %v920
        %925 = vst [vmem:[%s199] sm:$0xf] %v921
        %926 = vst [vmem:[%s199 + $0x4] sm:$0xf] %v922
        %s927 = sand.u32 %s112, 1
        %s928 = sand.u32 %s112, 1
        %s929 = smul.addr %s928, 8
        %s930 = scalar_lea.vmem [#allocation2], %s929
        // Predicated region
        $region37: #{dnn3_feature_forward.1} parent=35 // pred_check
          %p931 = pneg %p122
        $region38: #{dnn3_feature_forward.1} parent=35 // pred_check_branch
          %933 = sbr.rel (%p931) target = $region40
        $region39: #{dnn3_feature_forward.1} parent=35 // pred_region
          %s934 = smul.u32 2, %s15
          %s935 = ssub.s32 3, %s934
          %p936 = scmp.lt.s32.totalorder %s935, 2
          %s937 = scalar_select %p936, %s935, 2
          %s938 = smul.u32 64, %s937
          %p939 = scmp.ne.s32.totalorder 0, %s938
          %s940 = smul.addr %s934, 4
          %s941 = scalar_lea.vmem %s4, %s940
          // Predicated region
          $region41: #{dnn3_feature_forward.1} parent=39 // pred_check
            %p942 = pneg %p939
          $region42: #{dnn3_feature_forward.1} parent=39 // pred_check_branch
            %944 = sbr.rel (%p942) target = $region44
          $region43: #{dnn3_feature_forward.1} parent=39 // pred_region
            // Predicated region
            $region45: #{dnn3_feature_forward.1} parent=43 // pred_check
              _
            $region46: #{dnn3_feature_forward.1} parent=43 // pred_check_branch
              %946 = sbr.rel target = $region48
            $region47: #{dnn3_feature_forward.1} parent=43 // pred_region
              // Predicated region
              $region67: #{dnn3_feature_forward.1} parent=47 // pred_check
                _
              $region68: #{dnn3_feature_forward.1} parent=47 // pred_check_branch
                %997 = sbr.rel (0) target = $region70
              $region69: #{dnn3_feature_forward.1} parent=47 // pred_region
                %s999 = sshrl.u32 %s937, 1
                // While loop
                $region71: #{dnn3_feature_forward.1} parent=69 // loop_pre_header
                  _
                $region72: #{dnn3_feature_forward.1} parent=69 // loop_header
                  %s1001 = sphi 0, %s1003
                  %p1002 = scmp.ge.s32.totalorder %s1001, %s999
                  %s1006 = sphi 0, %s1015
                  %s1007 = sphi %s930, %s1018
                  %s1008 = sphi %s941, %s1019
                $region73: #{dnn3_feature_forward.1} parent=69 // loop_header_branch
                  %1005 = sbr.rel (%p1002) target = $region77
                $region74: #{dnn3_feature_forward.1} parent=69 // loop_body
                  %v1009 = vld [vmem:[%s1007] sm:$0xf]
                  %1010 = vst [vmem:[%s1008] sm:$0xf] %v1009
                  %v1011 = vld [vmem:[%s1007 + $0x4] sm:$0xf]
                  %1012 = vst [vmem:[%s1008 + $0x4] sm:$0xf] %v1011
                  %s1013 = sadd.s32 1, %s1006
                  %p1014 = scmp.ge.s32.totalorder %s1013, %s999
                  %s1015 = scalar_select %p1014, 0, %s1013
                  %s1016 = smul.u32 %s1015, 8
                  %s1017 = smul.u32 %s1015, 8
                  %s1018 = scalar_lea.vmem %s930, %s1016 [#allocation2]
                  %s1019 = scalar_lea.vmem %s941, %s1017
                $region75: #{dnn3_feature_forward.1} parent=69 // loop_footer
                  %s1003 = sadd.s32 %s1001, 1
                $region76: #{dnn3_feature_forward.1} parent=69 // loop_footer_branch
                  %1000 = sbr.rel target = $region72
                $region77: #{dnn3_feature_forward.1} parent=69 // loop_exit
                  _
                %s1020 = sshrl.u32 %s937, 1
                %s1021 = sand.u32 %s937, 1
                %s1022 = smul.u32 %s1020, 2
                %s1023 = smul.u32 4, %s1022
                %s1024 = scalar_lea.vmem %s930, %s1023 [#allocation2]
                %s1025 = smul.u32 4, %s1022
                %s1026 = scalar_lea.vmem %s941, %s1025
                // While loop
                $region78: #{dnn3_feature_forward.1} parent=69 // loop_pre_header
                  _
                $region79: #{dnn3_feature_forward.1} parent=69 // loop_header
                  %s1028 = sphi 0, %s1030
                  %p1029 = scmp.ge.s32.totalorder %s1028, %s1021
                  %s1033 = sphi 0, %s1040
                  %s1034 = sphi %s1024, %s1043
                  %s1035 = sphi %s1026, %s1044
                $region80: #{dnn3_feature_forward.1} parent=69 // loop_header_branch
                  %1032 = sbr.rel (%p1029) target = $region84
                $region81: #{dnn3_feature_forward.1} parent=69 // loop_body
                  %v1036 = vld [vmem:[%s1034] sm:$0xf]
                  %1037 = vst [vmem:[%s1035] sm:$0xf] %v1036
                  %s1038 = sadd.s32 1, %s1033
                  %p1039 = scmp.ge.s32.totalorder %s1038, %s1021
                  %s1040 = scalar_select %p1039, 0, %s1038
                  %s1041 = smul.u32 %s1040, 4
                  %s1042 = smul.u32 %s1040, 4
                  %s1043 = scalar_lea.vmem %s1024, %s1041 [#allocation2]
                  %s1044 = scalar_lea.vmem %s1026, %s1042
                $region82: #{dnn3_feature_forward.1} parent=69 // loop_footer
                  %s1030 = sadd.s32 %s1028, 1
                $region83: #{dnn3_feature_forward.1} parent=69 // loop_footer_branch
                  %1027 = sbr.rel target = $region79
                $region84: #{dnn3_feature_forward.1} parent=69 // loop_exit
                  _
              $region70: #{dnn3_feature_forward.1} parent=47 // pred_fallthru
                _
            $region48: #{dnn3_feature_forward.1} parent=43 // pred_fallthru
              _
            // Predicated region
            $region49: #{dnn3_feature_forward.1} parent=43 // pred_check
              _
            $region50: #{dnn3_feature_forward.1} parent=43 // pred_check_branch
              %948 = sbr.rel (0) target = $region52
            $region51: #{dnn3_feature_forward.1} parent=43 // pred_region
              %s950 = sshrl.u32 %s937, 1
              // While loop
              $region53: #{dnn3_feature_forward.1} parent=51 // loop_pre_header
                _
              $region54: #{dnn3_feature_forward.1} parent=51 // loop_header
                %s952 = sphi 0, %s954
                %p953 = scmp.ge.s32.totalorder %s952, %s950
                %s957 = sphi 0, %s966
                %s958 = sphi %s930, %s969
                %s959 = sphi %s941, %s970
              $region55: #{dnn3_feature_forward.1} parent=51 // loop_header_branch
                %956 = sbr.rel (%p953) target = $region59
              $region56: #{dnn3_feature_forward.1} parent=51 // loop_body
                %v960 = vld [vmem:[%s958] sm:$0xf]
                %961 = vst [vmem:[%s959] sm:$0xf] %v960
                %v962 = vld [vmem:[%s958 + $0x4] sm:$0xf]
                %963 = vst [vmem:[%s959 + $0x4] sm:$0xf] %v962
                %s964 = sadd.s32 1, %s957
                %p965 = scmp.ge.s32.totalorder %s964, %s950
                %s966 = scalar_select %p965, 0, %s964
                %s967 = smul.u32 %s966, 8
                %s968 = smul.u32 %s966, 8
                %s969 = scalar_lea.vmem %s930, %s967 [#allocation2]
                %s970 = scalar_lea.vmem %s941, %s968
              $region57: #{dnn3_feature_forward.1} parent=51 // loop_footer
                %s954 = sadd.s32 %s952, 1
              $region58: #{dnn3_feature_forward.1} parent=51 // loop_footer_branch
                %951 = sbr.rel target = $region54
              $region59: #{dnn3_feature_forward.1} parent=51 // loop_exit
                _
              %s971 = sshrl.u32 %s937, 1
              %s972 = sand.u32 %s937, 1
              %s973 = smul.u32 %s971, 2
              %s974 = smul.u32 4, %s973
              %s975 = scalar_lea.vmem %s930, %s974 [#allocation2]
              %s976 = smul.u32 4, %s973
              %s977 = scalar_lea.vmem %s941, %s976
              // While loop
              $region60: #{dnn3_feature_forward.1} parent=51 // loop_pre_header
                _
              $region61: #{dnn3_feature_forward.1} parent=51 // loop_header
                %s979 = sphi 0, %s981
                %p980 = scmp.ge.s32.totalorder %s979, %s972
                %s984 = sphi 0, %s991
                %s985 = sphi %s975, %s994
                %s986 = sphi %s977, %s995
              $region62: #{dnn3_feature_forward.1} parent=51 // loop_header_branch
                %983 = sbr.rel (%p980) target = $region66
              $region63: #{dnn3_feature_forward.1} parent=51 // loop_body
                %v987 = vld [vmem:[%s985] sm:$0xf]
                %988 = vst [vmem:[%s986] sm:$0xf] %v987
                %s989 = sadd.s32 1, %s984
                %p990 = scmp.ge.s32.totalorder %s989, %s972
                %s991 = scalar_select %p990, 0, %s989
                %s992 = smul.u32 %s991, 4
                %s993 = smul.u32 %s991, 4
                %s994 = scalar_lea.vmem %s975, %s992 [#allocation2]
                %s995 = scalar_lea.vmem %s977, %s993
              $region64: #{dnn3_feature_forward.1} parent=51 // loop_footer
                %s981 = sadd.s32 %s979, 1
              $region65: #{dnn3_feature_forward.1} parent=51 // loop_footer_branch
                %978 = sbr.rel target = $region61
              $region66: #{dnn3_feature_forward.1} parent=51 // loop_exit
                _
            $region52: #{dnn3_feature_forward.1} parent=43 // pred_fallthru
              _
          $region44: #{dnn3_feature_forward.1} parent=39 // pred_fallthru
            _
          %1045 = vnop
        $region40: #{dnn3_feature_forward.1} parent=35 // pred_fallthru
          _
      $region36: #{dnn3_feature_forward.1} parent=5 // pred_fallthru
        _
      %p1046 = scmp.le.s32.totalorder 2, %s10
      // Predicated region
      $region85: #{dnn3_feature_forward.1} parent=5 // pred_check
        %p1047 = pneg %p1046
      $region86: #{dnn3_feature_forward.1} parent=5 // pred_check_branch
        %1049 = sbr.rel (%p1047) target = $region88
      $region87: #{dnn3_feature_forward.1} parent=5 // pred_region
        %s1050 = ssub.s32 %s10, 2
        // Predicated region
        $region89: #{dnn3_feature_forward.1} parent=87 // pred_check
          %p1051 = pneg %p128
        $region90: #{dnn3_feature_forward.1} parent=87 // pred_check_branch
          %1053 = sbr.rel (%p1051) target = $region92
        $region91: #{dnn3_feature_forward.1} parent=87 // pred_region
          %s1054 = sand.u32 %s113, 1
          %s1055 = sand.u32 %s113, 1
          %s1056 = smul.addr %s1055, 8
          %s1057 = scalar_lea.vmem [#allocation2], %s1056
        $region92: #{dnn3_feature_forward.1} parent=87 // pred_fallthru
          _
      $region88: #{dnn3_feature_forward.1} parent=5 // pred_fallthru
        _
    $region6: #{dnn3_feature_forward.1} parent=1 // loop_footer
      %s14 = sadd.s32 1, %s10
    $region7: #{dnn3_feature_forward.1} parent=1 // loop_footer_branch
      %9 = sbr.rel target = $region3
    $region8: #{dnn3_feature_forward.1} parent=1 // loop_exit
      _

</llo_original>
